<compile_context>
chip_gen: v7x
topology: tpu7x:2x2x1
jax: 0.10.0
libtpu: 0.0.40
codegen_flags: <defaults>
</compile_context>

<pallas_src>
import jax
import jax.numpy as jnp
from jax import lax
from jax.experimental import pallas as pl
from jax.experimental.pallas import tpu as pltpu

_LANE = 128
_TARGET_BLOCK_BYTES = 4 * 1024 * 1024       # ~4 MiB per array per block
_VMEM_LIMIT_BYTES = 48 * 1024 * 1024        # < 64 MiB (v7x physical VMEM)
_ERF_SCALE = 15.0 * 0.7071067811865476      # 15 / sqrt(2)


def _add_scale_gelu_kernel(x_ref, y_ref, o_ref):
    # z = (x + y) * 15 ; GELU(z) = 0.5 * z * (1 + erf(z / sqrt(2)))
    # Folded:           = (7.5 * s) * (1 + erf(s * 15/sqrt(2))),  s = x + y
    s = x_ref[...].astype(jnp.float32) + y_ref[...].astype(jnp.float32)
    g = (7.5 * s) * (1.0 + lax.erf(s * _ERF_SCALE))
    o_ref[...] = g.astype(o_ref.dtype)


def _choose_lane(n, sublane):
    """Widest multiple-of-128 lane dividing n, preferring rows that fill all
    sublanes (rows >= sublane, rows % sublane == 0). None if no lane divides n."""
    candidates = [w for w in (4096, 2048, 1024, 512, 256, 128) if n % w == 0]
    if not candidates:
        return None
    for cond in (lambda r: r >= sublane and r % sublane == 0,
                 lambda r: r >= sublane):
        ok = [w for w in candidates if cond(n // w)]
        if ok:
            return max(ok)
    return max(candidates)  # tiny array: rows < sublane regardless


def _choose_tile_rows(rows, sublane, lane, itemsize):
    """tile_rows that divides rows, is a sublane multiple, targets ~4 MiB/array
    blocks and prefers an even number of grid steps (v7x 2-TC balance)."""
    max_tile_rows = max(sublane, _TARGET_BLOCK_BYTES // (lane * itemsize))
    max_tile_rows = max(sublane, (max_tile_rows // sublane) * sublane)

    if rows <= 2 * sublane:
        # Too small to split usefully: one full-rows block (full-dim is legal).
        return rows

    cands = []
    t = sublane
    limit = min(rows // 2, max_tile_rows)   # grid of at least 2 steps
    while t <= limit:
        if rows % t == 0:
            cands.append(t)
        t += sublane
    if cands:
        even = [t for t in cands if (rows // t) % 2 == 0]
        pool = even if even else cands
        return max(pool)                    # fewest steps among preferred

    # rows not nicely divisible: sublane-multiple tile + ragged (masked) tail.
    return min(max_tile_rows, max(sublane, ((rows // 2) // sublane) * sublane))


def _run_2d(xf, yf, tile_rows):
    rows, lane = xf.shape
    grid = (pl.cdiv(rows, tile_rows),)
    return pl.pallas_call(
        _add_scale_gelu_kernel,
        out_shape=jax.ShapeDtypeStruct((rows, lane), xf.dtype),
        grid=grid,
        in_specs=[
            pl.BlockSpec((tile_rows, lane), lambda i: (i, 0)),
            pl.BlockSpec((tile_rows, lane), lambda i: (i, 0)),
        ],
        out_specs=pl.BlockSpec((tile_rows, lane), lambda i: (i, 0)),
        compiler_params=pltpu.CompilerParams(
            dimension_semantics=("parallel",),   # shards across v7x's 2 TCs
            vmem_limit_bytes=_VMEM_LIMIT_BYTES,
        ),
    )(xf, yf)


def sample_model_forward(x, y):
    """Pallas implementation of SampleModel.forward: GELU((x + y) * 15)."""
    assert x.shape == y.shape and x.dtype == y.dtype
    orig_shape = x.shape
    dtype = x.dtype
    n = x.size
    if n == 0:
        return x

    itemsize = jnp.dtype(dtype).itemsize
    sublane = max(8, 32 // itemsize)   # 8 for f32, 16 for bf16, 32 for int8

    xf = x.reshape(-1)
    yf = y.reshape(-1)

    lane = _choose_lane(n, sublane)
    if lane is not None:
        rows = n // lane
        tile_rows = _choose_tile_rows(rows, sublane, lane, itemsize)
        out = _run_2d(xf.reshape(rows, lane), yf.reshape(rows, lane), tile_rows)
        return out.reshape(orig_shape)

    # No multiple-of-128 lane divides n.  Process the bulk lane-dense with no
    # copies; only the (< 128-element) tail is padded into a single (1, 128)
    # block, avoiding a full-array pad / extra HBM pass.
    n_main = (n // _LANE) * _LANE
    parts = []
    if n_main:
        rows = n_main // _LANE
        tile_rows = _choose_tile_rows(rows, sublane, _LANE, itemsize)
        main = _run_2d(xf[:n_main].reshape(rows, _LANE),
                       yf[:n_main].reshape(rows, _LANE), tile_rows)
        parts.append(main.reshape(-1))
    tail = n - n_main
    if tail:
        pad = _LANE - tail
        xt = jnp.pad(xf[n_main:], (0, pad)).reshape(1, _LANE)
        yt = jnp.pad(yf[n_main:], (0, pad)).reshape(1, _LANE)
        tout = _run_2d(xt, yt, 1)
        parts.append(tout.reshape(-1)[:tail])
    flat = parts[0] if len(parts) == 1 else jnp.concatenate(parts)
    return flat.reshape(orig_shape)


def _reference(x, y):
    z = (x + y) * 15.0
    return jax.nn.gelu(z, approximate=False)


if __name__ == "__main__":
    key = jax.random.PRNGKey(0)

    # 1) Primary small NCHW-shaped inputs (as implied by the module's usage).
    kx, ky = jax.random.split(key)
    x = jax.random.normal(kx, (2, 4, 16, 16), dtype=jnp.float32)
    y = jax.random.normal(ky, (2, 4, 16, 16), dtype=jnp.float32)
    out = jax.block_until_ready(sample_model_forward(x, y))
    ref = _reference(x, y)
    assert out.shape == ref.shape
    assert jnp.allclose(out, ref, atol=5e-5, rtol=1e-5)

    # 2) Multi-block path with an even grid-step count (v7x 2-TC balance).
    kx2, ky2 = jax.random.split(jax.random.PRNGKey(1))
    x2 = jax.random.normal(kx2, (4, 8, 64, 64), dtype=jnp.float32)
    y2 = jax.random.normal(ky2, (4, 8, 64, 64), dtype=jnp.float32)
    out2 = jax.block_until_ready(sample_model_forward(x2, y2))
    ref2 = _reference(x2, y2)
    assert out2.shape == ref2.shape
    assert jnp.allclose(out2, ref2, atol=5e-5, rtol=1e-5)

    # 3) Ragged size (231 elements): bulk + tiny padded tail path.
    kx3, ky3 = jax.random.split(jax.random.PRNGKey(2))
    x3 = jax.random.normal(kx3, (3, 7, 11), dtype=jnp.float32)
    y3 = jax.random.normal(ky3, (3, 7, 11), dtype=jnp.float32)
    out3 = jax.block_until_ready(sample_model_forward(x3, y3))
    ref3 = _reference(x3, y3)
    assert out3.shape == ref3.shape
    assert jnp.allclose(out3, ref3, atol=5e-5, rtol=1e-5)

    print("KERNEL_OK")
</pallas_src>

<mosaic_0001>
module attributes {stable_mosaic.version = 11 : i64} {
  func.func @_add_scale_gelu_kernel(%arg0: i32, %arg1: memref<8x256xf32, #tpu.memory_space<vmem>>, %arg2: memref<8x256xf32, #tpu.memory_space<vmem>>, %arg3: memref<8x256xf32, #tpu.memory_space<vmem>>) attributes {dimension_semantics = [#tpu.dimension_semantics<parallel>], iteration_bounds = array<i64: 1>, scalar_prefetch = 0 : i64, scratch_operands = 0 : i64, tpu.core_type = #tpu.core_type<tc>, window_params = [{transform_indices = @transform_0, window_bounds = array<i64: 8, 256>}, {transform_indices = @transform_1, window_bounds = array<i64: 8, 256>}, {transform_indices = @transform_2, window_bounds = array<i64: 8, 256>}]} {
    %c0 = arith.constant 0 : index
    %c0_0 = arith.constant 0 : index
    %0 = vector.load %arg1[%c0, %c0_0] : memref<8x256xf32, #tpu.memory_space<vmem>>, vector<8x256xf32>
    %c0_1 = arith.constant 0 : index
    %c0_2 = arith.constant 0 : index
    %1 = vector.load %arg2[%c0_1, %c0_2] : memref<8x256xf32, #tpu.memory_space<vmem>>, vector<8x256xf32>
    %2 = arith.addf %0, %1 : vector<8x256xf32>
    %cst = arith.constant 7.500000e+00 : f32
    %3 = vector.broadcast %cst : f32 to vector<8x256xf32>
    %4 = arith.mulf %3, %2 : vector<8x256xf32>
    %cst_3 = arith.constant 10.6066017 : f32
    %5 = vector.broadcast %cst_3 : f32 to vector<8x256xf32>
    %6 = arith.mulf %2, %5 : vector<8x256xf32>
    %7 = math.erf %6 : vector<8x256xf32>
    %cst_4 = arith.constant 1.000000e+00 : f32
    %8 = vector.broadcast %cst_4 : f32 to vector<8x256xf32>
    %9 = arith.addf %8, %7 : vector<8x256xf32>
    %10 = arith.mulf %4, %9 : vector<8x256xf32>
    %c0_5 = arith.constant 0 : index
    %c0_6 = arith.constant 0 : index
    %11 = vector.load %arg3[%c0_5, %c0_6] : memref<8x256xf32, #tpu.memory_space<vmem>>, vector<8x256xf32>
    tpu.vector_store %arg3[%c0_5, %c0_6], %10 {strides = array<i32>} : memref<8x256xf32, #tpu.memory_space<vmem>>, vector<8x256xf32>,
    return
  }
  func.func @transform_0(%arg0: i32) -> (i32, i32) {
    %c0_i32 = arith.constant 0 : i32
    %c0_i32_0 = arith.constant 0 : i32
    return %arg0, %c0_i32 : i32, i32
  }
  func.func @transform_1(%arg0: i32) -> (i32, i32) {
    %c0_i32 = arith.constant 0 : i32
    %c0_i32_0 = arith.constant 0 : i32
    return %arg0, %c0_i32 : i32, i32
  }
  func.func @transform_2(%arg0: i32) -> (i32, i32) {
    %c0_i32 = arith.constant 0 : i32
    %c0_i32_0 = arith.constant 0 : i32
    return %arg0, %c0_i32 : i32, i32
  }
}

</mosaic_0001>

<llo_original>
// kernel: tpu_custom_call.1
$region0: #{tpu_custom_call.1}
  #allocation0 [shape = 'u32[]', space=smem, size = 0x4, offset = 0x4, fixed_abs, tag = 'smem constant byte address 0x4 - core index']
  #allocation1 [shape = 'u32[144,128]{1,0:T(1,128)}', space=vmem, size = 0x12000, scoped, tag = 'internal scratch']
  %s0 = inlined_call_operand.hbm [shape: f32[8,256], index: 0, kind: input, shape index: {}]
  %s1 = inlined_call_operand.hbm [shape: f32[8,256], index: 1, kind: input, shape index: {}]
  %s2 = inlined_call_operand.hbm [shape: f32[8,256], index: 2, kind: output, shape index: {}]
  %s3 = sld [smem:[#allocation0]]
  $region26: #{tpu_custom_call.1} parent=0
    _
  %s5 = ssub.s32 1, %s3
  %s6 = scalar_select 0, %s5, %s3
  $region1: #{tpu_custom_call.1} parent=0
    #allocation2 [shape = 'u8[8192]{0}', space=vmem, size = 0x2000, scoped, tag = 'input window, operand 0, single buffered']
    #allocation3 [shape = 's32[1]{0}', space=sflag, size = 0x4, scoped, tag = 'scoped memory for tpu_custom_call.1']
    #allocation4 [shape = 's32[1]{0}', space=sflag, size = 0x4, scoped, tag = 'scoped memory for tpu_custom_call.1']
    #allocation5 [shape = 'u8[8192]{0}', space=vmem, size = 0x2000, scoped, tag = 'input window, operand 1, single buffered']
    #allocation6 [shape = 's32[1]{0}', space=sflag, size = 0x4, scoped, tag = 'scoped memory for tpu_custom_call.1']
    #allocation7 [shape = 'u8[8192]{0}', space=vmem, size = 0x2000, scoped, tag = 'output window, operand 0, single buffered']
    %7 = vsyncpa [#allocation3], 0
    %8 = vsyncpa [#allocation6], 0
    %9 = vsyncpa [#allocation4], 0
    // Predicated region
    $region2: #{tpu_custom_call.1} parent=1 // pred_check
      _
    $region3: #{tpu_custom_call.1} parent=1 // pred_check_branch
      %11 = sbr.rel (0) target = $region5
    $region4: #{tpu_custom_call.1} parent=1 // pred_region
      %s13 = ssub.s32 256, 256
      %14 = vsyncadd [#allocation3], %s13
      %s16 = sshll.u32 [#allocation2], 4
      %s17 = int_to_ptr.vmem [resolvable:$true] %s16
      %19 = dma.hbm_to_vmem [thread:$0]  %s0, 256, %s17, [#allocation3]
    $region5: #{tpu_custom_call.1} parent=1 // pred_fallthru
      _
    // Predicated region
    $region6: #{tpu_custom_call.1} parent=1 // pred_check
      _
    $region7: #{tpu_custom_call.1} parent=1 // pred_check_branch
      %21 = sbr.rel (0) target = $region9
    $region8: #{tpu_custom_call.1} parent=1 // pred_region
      %s23 = ssub.s32 256, 256
      %24 = vsyncadd [#allocation6], %s23
      %s26 = sshll.u32 [#allocation5], 4
      %s27 = int_to_ptr.vmem [resolvable:$true] %s26
      %29 = dma.hbm_to_vmem [thread:$0]  %s1, 256, %s27, [#allocation6]
    $region9: #{tpu_custom_call.1} parent=1 // pred_fallthru
      _
    // Predicated region
    $region10: #{tpu_custom_call.1} parent=1 // pred_check
      _
    $region11: #{tpu_custom_call.1} parent=1 // pred_check_branch
      %31 = sbr.rel (0) target = $region13
    $region12: #{tpu_custom_call.1} parent=1 // pred_region
      %32 = dma.done [#allocation3], 256
    $region13: #{tpu_custom_call.1} parent=1 // pred_fallthru
      _
    // Predicated region
    $region14: #{tpu_custom_call.1} parent=1 // pred_check
      _
    $region15: #{tpu_custom_call.1} parent=1 // pred_check_branch
      %34 = sbr.rel (0) target = $region17
    $region16: #{tpu_custom_call.1} parent=1 // pred_region
      %35 = dma.done [#allocation6], 256
    $region17: #{tpu_custom_call.1} parent=1 // pred_fallthru
      _
    %v36 = vld [vmem:[#allocation2] sm:$0xff]
    %v37 = vld [vmem:[#allocation2 + $0x8] sm:$0xff]
    %v38 = vld [vmem:[#allocation5] sm:$0xff]
    %v39 = vld [vmem:[#allocation5 + $0x8] sm:$0xff]
    %v40 = vadd.f32 %v36, %v38
    %v41 = vadd.f32 %v37, %v39
    %v42 = vmul.f32 %v40, 7.5
    %v43 = vmul.f32 %v41, 7.5
    %v44 = vmul.f32 %v40, 10.606602
    %v45 = vmul.f32 %v41, 10.606602
    %v46 = verf.f32.pop %v44
    %v47 = verf.f32.pop %v45
    %v48 = vadd.f32 %v46, 1.0
    %v49 = vadd.f32 %v47, 1.0
    %v50 = vmul.f32 %v42, %v48
    %v51 = vmul.f32 %v43, %v49
    %52 = vst [vmem:[#allocation7] sm:$0xff] %v50
    %53 = vst [vmem:[#allocation7 + $0x8] sm:$0xff] %v51
    // Predicated region
    $region18: #{tpu_custom_call.1} parent=1 // pred_check
      _
    $region19: #{tpu_custom_call.1} parent=1 // pred_check_branch
      %55 = sbr.rel (0) target = $region21
    $region20: #{tpu_custom_call.1} parent=1 // pred_region
      %s57 = ssub.s32 256, 256
      %58 = vsyncadd [#allocation4], %s57
      %s60 = sshll.u32 [#allocation7], 4
      %s61 = int_to_ptr.vmem [resolvable:$true] %s60
      %63 = dma.vmem_to_hbm [thread:$0]  %s61, 256, %s2, [#allocation4]
    $region21: #{tpu_custom_call.1} parent=1 // pred_fallthru
      _
    // Predicated region
    $region22: #{tpu_custom_call.1} parent=1 // pred_check
      _
    $region23: #{tpu_custom_call.1} parent=1 // pred_check_branch
      %65 = sbr.rel (0) target = $region25
    $region24: #{tpu_custom_call.1} parent=1 // pred_region
      %66 = dma.done [#allocation4], 256
    $region25: #{tpu_custom_call.1} parent=1 // pred_fallthru
      _
    %67 = vsyncpa [#allocation3], 1
    %68 = vsyncpa [#allocation6], 1
    %69 = vsyncpa [#allocation4], 1

</llo_original>
